<compile_context>
chip_gen: v7x
topology: tpu7x:2x2x1
jax: 0.10.0
libtpu: 0.0.40
codegen_flags: <defaults>
</compile_context>

<pallas_src>
import jax
import jax.numpy as jnp
from jax.experimental import pallas as pl
from jax.experimental.pallas import tpu as pltpu

_LANE = 128  # vreg lane width


def _sublane_tile(dtype):
    # Packed sublane tile: f32 -> 8, bf16/f16 -> 16, int8/fp8 -> 32.
    return max(8, 32 // jnp.dtype(dtype).itemsize)


def _with_mask_kernel(value_ref, x_ref, mask_ref, out_ref):
    """value_ref: SMEM (1,); x_ref/mask_ref/out_ref: VMEM (block_rows, 128)."""
    val = value_ref[0].astype(x_ref.dtype)
    eq = (x_ref[...] == val).astype(out_ref.dtype)
    # Multiply (not select) so NaN/Inf in `mask` propagate like torch's
    # `x.eq(v).type_as(x) * mask` (0 * NaN == NaN).
    out_ref[...] = eq * mask_ref[...].astype(out_ref.dtype)


def _with_mask_nomask_kernel(value_ref, x_ref, out_ref):
    """mask=None path: out_mask = (x == value) cast to x.dtype."""
    val = value_ref[0].astype(x_ref.dtype)
    out_ref[...] = (x_ref[...] == val).astype(out_ref.dtype)


def with_mask(x, mask=None, value=0.0, block_rows=None):
    """JAX/Pallas equivalent of WithMask(value).forward(x, mask)."""
    orig_shape = x.shape
    n = x.size
    if mask is not None:
        assert mask.shape == x.shape
        out_dtype = jnp.result_type(x.dtype, mask.dtype)
    else:
        out_dtype = x.dtype

    dtypes = [x.dtype, out_dtype] + ([mask.dtype] if mask is not None else [])
    sublane = max(_sublane_tile(d) for d in dtypes)
    widest = max(jnp.dtype(d).itemsize for d in dtypes)

    # ~2 MiB per block in the widest dtype (1-4 MiB sweet spot; amortizes the
    # ~0.35 us per-grid-step overhead; 3 streams x 2 buffers = 12 MiB VMEM).
    if block_rows is None:
        block_rows = (2 * 1024 * 1024) // (_LANE * widest)
    block_rows = max(sublane, (block_rows // sublane) * sublane)

    # Minimal lane padding: only up to a multiple of 128 so the flat tensor
    # can be viewed as (rows, 128).  The ragged last *row block* is handled by
    # Pallas' edge-block masking (block_shape need not divide the array).
    rows = pl.cdiv(n, _LANE)
    padded = rows * _LANE

    # Cap the row block at ~rows/2 (sublane-aligned) so the grid has >= 2
    # steps whenever possible -> both v7x TensorCores get work.
    if rows <= sublane:
        br = rows  # single block == full array extent (always legal)
    else:
        half = pl.cdiv(pl.cdiv(rows, 2), sublane) * sublane
        br = min(block_rows, half)
    grid_rows = pl.cdiv(rows, br)

    def _flat(a):
        a = a.reshape(-1)
        if padded != n:
            a = jnp.pad(a, (0, padded - n))
        return a.reshape(rows, _LANE)

    x2 = _flat(x)
    if jnp.issubdtype(x.dtype, jnp.integer):
        value_arr = jnp.asarray([value], dtype=jnp.int32)
    else:
        value_arr = jnp.asarray([value], dtype=jnp.float32)

    value_spec = pl.BlockSpec(memory_space=pltpu.MemorySpace.SMEM)  # (1,) scalar
    row_spec = pl.BlockSpec((br, _LANE), lambda i: (i, 0))          # VMEM row blocks
    cparams = pltpu.CompilerParams(
        dimension_semantics=("parallel",),
        vmem_limit_bytes=32 * 1024 * 1024,
    )
    out_shape2 = jax.ShapeDtypeStruct((rows, _LANE), out_dtype)

    if mask is not None:
        m2 = _flat(mask)
        out2 = pl.pallas_call(
            _with_mask_kernel,
            out_shape=out_shape2,
            grid=(grid_rows,),
            in_specs=[value_spec, row_spec, row_spec],
            out_specs=row_spec,
            compiler_params=cparams,
        )(value_arr, x2, m2)
    else:
        out2 = pl.pallas_call(
            _with_mask_nomask_kernel,
            out_shape=out_shape2,
            grid=(grid_rows,),
            in_specs=[value_spec, row_spec],
            out_specs=row_spec,
            compiler_params=cparams,
        )(value_arr, x2)

    if padded != n:
        out_mask = out2.reshape(-1)[:n].reshape(orig_shape)
    else:
        out_mask = out2.reshape(orig_shape)
    # The module returns the input x unchanged alongside the new mask.
    return x, out_mask


if __name__ == "__main__":
    key = jax.random.PRNGKey(0)
    kx, kz, km = jax.random.split(key, 3)

    # Keypoint-style batched tensor: (N, C, T, V)
    N, C, T, V = 2, 3, 16, 25
    value = 0.0

    x = jax.random.normal(kx, (N, C, T, V), dtype=jnp.float32)
    # Plant exact `value` entries so x.eq(value) takes both outcomes.
    x = jnp.where(jax.random.uniform(kz, (N, C, T, V)) < 0.3, jnp.float32(value), x)
    mask = (jax.random.uniform(km, (N, C, T, V)) > 0.1).astype(jnp.float32)

    # With mask.
    x_out, out_mask = with_mask(x, mask, value=value)
    jax.block_until_ready((x_out, out_mask))

    ref = (x == value).astype(x.dtype) * mask
    assert x_out.shape == x.shape and out_mask.shape == x.shape
    assert bool(jnp.allclose(x_out, x))
    assert bool(jnp.allclose(out_mask, ref))

    # mask=None path.
    x_out2, out_mask2 = with_mask(x, None, value=value)
    jax.block_until_ready((x_out2, out_mask2))
    ref2 = (x == value).astype(x.dtype)
    assert bool(jnp.allclose(x_out2, x))
    assert bool(jnp.allclose(out_mask2, ref2))

    print("KERNEL_OK")
</pallas_src>

<mosaic_0001>
module attributes {stable_mosaic.version = 11 : i64} {
  func.func @_with_mask_kernel(%arg0: i32, %arg1: memref<1xf32, #tpu.memory_space<smem>>, %arg2: memref<16x128xf32, #tpu.memory_space<vmem>>, %arg3: memref<16x128xf32, #tpu.memory_space<vmem>>, %arg4: memref<16x128xf32, #tpu.memory_space<vmem>>) attributes {dimension_semantics = [#tpu.dimension_semantics<parallel>], iteration_bounds = array<i64: 2>, scalar_prefetch = 0 : i64, scratch_operands = 0 : i64, tpu.core_type = #tpu.core_type<tc>, window_params = [{transform_indices = @transform_0, window_bounds = array<i64: 1>}, {transform_indices = @transform_1, window_bounds = array<i64: 16, 128>}, {transform_indices = @transform_2, window_bounds = array<i64: 16, 128>}, {transform_indices = @transform_3, window_bounds = array<i64: 16, 128>}]} {
    %c0 = arith.constant 0 : index
    %0 = memref.load %arg1[%c0] : memref<1xf32, #tpu.memory_space<smem>>
    %c0_0 = arith.constant 0 : index
    %c0_1 = arith.constant 0 : index
    %1 = vector.load %arg2[%c0_0, %c0_1] : memref<16x128xf32, #tpu.memory_space<vmem>>, vector<16x128xf32>
    %2 = vector.broadcast %0 : f32 to vector<16x128xf32>
    %3 = arith.cmpf oeq, %1, %2 : vector<16x128xf32>
    %4 = arith.extui %3 : vector<16x128xi1> to vector<16x128xi32>
    %5 = arith.sitofp %4 : vector<16x128xi32> to vector<16x128xf32>
    %c0_2 = arith.constant 0 : index
    %c0_3 = arith.constant 0 : index
    %6 = vector.load %arg3[%c0_2, %c0_3] : memref<16x128xf32, #tpu.memory_space<vmem>>, vector<16x128xf32>
    %7 = arith.mulf %5, %6 : vector<16x128xf32>
    %c0_4 = arith.constant 0 : index
    %c0_5 = arith.constant 0 : index
    %8 = vector.load %arg4[%c0_4, %c0_5] : memref<16x128xf32, #tpu.memory_space<vmem>>, vector<16x128xf32>
    tpu.vector_store %arg4[%c0_4, %c0_5], %7 {strides = array<i32>} : memref<16x128xf32, #tpu.memory_space<vmem>>, vector<16x128xf32>,
    return
  }
  func.func @transform_0(%arg0: i32) -> i32 {
    %c0_i32 = arith.constant 0 : i32
    %c0_i32_0 = arith.constant 0 : i32
    return %c0_i32 : i32
  }
  func.func @transform_1(%arg0: i32) -> (i32, i32) {
    %c0_i32 = arith.constant 0 : i32
    %c0_i32_0 = arith.constant 0 : i32
    return %arg0, %c0_i32 : i32, i32
  }
  func.func @transform_2(%arg0: i32) -> (i32, i32) {
    %c0_i32 = arith.constant 0 : i32
    %c0_i32_0 = arith.constant 0 : i32
    return %arg0, %c0_i32 : i32, i32
  }
  func.func @transform_3(%arg0: i32) -> (i32, i32) {
    %c0_i32 = arith.constant 0 : i32
    %c0_i32_0 = arith.constant 0 : i32
    return %arg0, %c0_i32 : i32, i32
  }
}

</mosaic_0001>

<llo_original>
// kernel: tpu_custom_call.1
$region0: #{tpu_custom_call.1}
  #allocation0 [shape = 'u32[]', space=smem, size = 0x4, offset = 0x4, fixed_abs, tag = 'smem constant byte address 0x4 - core index']
  #allocation1 [shape = 'u32[144,128]{1,0:T(1,128)}', space=vmem, size = 0x12000, scoped, tag = 'internal scratch']
  #allocation2 [shape = 'f32[1]{0:T(128)S(6)}', space=smem, size = 0x200, scoped, tag = 'scoped memory for tpu_custom_call.1']
  %s0 = inlined_call_operand.<no memory space> [shape: f32[1], index: 0, kind: input, shape index: {}]
  %s1 = inlined_call_operand.hbm [shape: f32[19,128], index: 1, kind: input, shape index: {}]
  %s2 = inlined_call_operand.hbm [shape: f32[19,128], index: 2, kind: input, shape index: {}]
  %s3 = inlined_call_operand.hbm [shape: f32[19,128], index: 3, kind: output, shape index: {}]
  %s4 = sld [smem:[#allocation0]]
  $region53: #{tpu_custom_call.1} parent=0
    _
  %s6 = ssub.s32 1, %s4
  %s7 = scalar_select 0, %s6, %s4
  %8 = sst [smem:[#allocation2]] %s0
  $region1: #{tpu_custom_call.1} parent=0
    #allocation3 [shape = 'u8[16384]{0}', space=vmem, size = 0x4000, scoped, tag = 'input window, operand 1']
    #allocation4 [shape = 's32[2]{0}', space=sflag, size = 0x8, scoped, tag = 'scoped memory for tpu_custom_call.1']
    #allocation5 [shape = 's32[2]{0}', space=sflag, size = 0x8, scoped, tag = 'scoped memory for tpu_custom_call.1']
    #allocation6 [shape = 'u8[16384]{0}', space=vmem, size = 0x4000, scoped, tag = 'input window, operand 2']
    #allocation7 [shape = 's32[2]{0}', space=sflag, size = 0x8, scoped, tag = 'scoped memory for tpu_custom_call.1']
    #allocation8 [shape = 'u8[16384]{0}', space=vmem, size = 0x4000, scoped, tag = 'output window, operand 0']
    %9 = vsyncpa [#allocation4], 0
    %s10 = scalar_lea.sflag [#allocation4], 1
    %11 = vsyncpa %s10, 0
    %12 = vsyncpa [#allocation7], 0
    %s13 = scalar_lea.sflag [#allocation7], 1
    %14 = vsyncpa %s13, 0
    %15 = vsyncpa [#allocation5], 0
    %s16 = scalar_lea.sflag [#allocation5], 1
    %17 = vsyncpa %s16, 0
    loop: start=0, step=1, limit=4
    $region2: #{tpu_custom_call.1} parent=1 // loop_pre_header
      _
    $region3: #{tpu_custom_call.1} parent=1 // loop_header
      %s19 = sphi 0, %s23
      %p20 = scmp.ge.s32.totalorder %s19, 4
      %s27 = sphi 0, %s27
      %s29 = sphi 0, %s27
      %s30 = sphi 0, %s29
      %s44 = sphi 0, %s30
      %s50 = sphi 0, %s52
      %s53 = sphi 0, %s50
      %s54 = sphi 0, %s53
      %s70 = sphi 0, %s54
      %s76 = sphi 0, %s78
      %s79 = sphi 0, %s76
      %s80 = sphi 0, %s79
      %s96 = sphi 0, %s80
      %s102 = sphi 0, %s104
      %s105 = sphi 0, %s102
      %s106 = sphi 0, %s105
      %s122 = sphi 0, %s106
    $region4: #{tpu_custom_call.1} parent=1 // loop_header_branch
      %22 = sbr.rel (%p20) target = $region8
    $region5: #{tpu_custom_call.1} parent=1 // loop_body
      %s24 = ssub.s32 %s19, 1
      %s25 = ssub.s32 %s19, 2
      %s26 = sadd.s32 %s19, 1
      %s28 = sadd.s32 %s27, 1
      %p31 = scmp.eq.s32.totalorder %s19, 1
      %p32 = scmp.ne.s32.totalorder %s27, %s29
      %p33 = scmp.eq.s32.totalorder %s19, 0
      %p34 = por %p32, %p33
      %p35 = scmp.ne.s32.totalorder %s27, %s29
      %p36 = scmp.eq.s32.totalorder %s24, 1
      %p37 = por %p35, %p36
      %p38 = scmp.ne.s32.totalorder %s29, %s30
      %p39 = scmp.eq.s32.totalorder %s24, 0
      %p40 = por %p38, %p39
      %p41 = scmp.ne.s32.totalorder %s29, %s30
      %p42 = scmp.eq.s32.totalorder %s25, 1
      %p43 = por %p41, %p42
      %p45 = scmp.ne.s32.totalorder %s30, %s44
      %p46 = scmp.eq.s32.totalorder %s25, 0
      %p47 = por %p45, %p46
      %s48 = ssub.s32 %s19, %s26
      %p49 = scmp.eq.s32.totalorder %s48, 0
      %s51 = sadd.s32 %s50, 1
      %s52 = scalar_select %p49, %s50, %s51
      %p55 = pneg %p49
      %p56 = scmp.eq.s32.totalorder %s19, 1
      %p57 = por %p55, %p56
      %p58 = scmp.ne.s32.totalorder %s50, %s53
      %p59 = scmp.eq.s32.totalorder %s19, 0
      %p60 = por %p58, %p59
      %p61 = scmp.ne.s32.totalorder %s50, %s53
      %p62 = scmp.eq.s32.totalorder %s24, 1
      %p63 = por %p61, %p62
      %p64 = scmp.ne.s32.totalorder %s53, %s54
      %p65 = scmp.eq.s32.totalorder %s24, 0
      %p66 = por %p64, %p65
      %p67 = scmp.ne.s32.totalorder %s53, %s54
      %p68 = scmp.eq.s32.totalorder %s25, 1
      %p69 = por %p67, %p68
      %p71 = scmp.ne.s32.totalorder %s54, %s70
      %p72 = scmp.eq.s32.totalorder %s25, 0
      %p73 = por %p71, %p72
      %s74 = ssub.s32 %s19, %s26
      %p75 = scmp.eq.s32.totalorder %s74, 0
      %s77 = sadd.s32 %s76, 1
      %s78 = scalar_select %p75, %s76, %s77
      %p81 = pneg %p75
      %p82 = scmp.eq.s32.totalorder %s19, 1
      %p83 = por %p81, %p82
      %p84 = scmp.ne.s32.totalorder %s76, %s79
      %p85 = scmp.eq.s32.totalorder %s19, 0
      %p86 = por %p84, %p85
      %p87 = scmp.ne.s32.totalorder %s76, %s79
      %p88 = scmp.eq.s32.totalorder %s24, 1
      %p89 = por %p87, %p88
      %p90 = scmp.ne.s32.totalorder %s79, %s80
      %p91 = scmp.eq.s32.totalorder %s24, 0
      %p92 = por %p90, %p91
      %p93 = scmp.ne.s32.totalorder %s79, %s80
      %p94 = scmp.eq.s32.totalorder %s25, 1
      %p95 = por %p93, %p94
      %p97 = scmp.ne.s32.totalorder %s80, %s96
      %p98 = scmp.eq.s32.totalorder %s25, 0
      %p99 = por %p97, %p98
      %s100 = ssub.s32 %s19, %s26
      %p101 = scmp.eq.s32.totalorder %s100, 0
      %s103 = sadd.s32 %s102, 1
      %s104 = scalar_select %p101, %s102, %s103
      %p107 = pneg %p101
      %p108 = scmp.eq.s32.totalorder %s19, 1
      %p109 = por %p107, %p108
      %p110 = scmp.ne.s32.totalorder %s102, %s105
      %p111 = scmp.eq.s32.totalorder %s19, 0
      %p112 = por %p110, %p111
      %p113 = scmp.ne.s32.totalorder %s102, %s105
      %p114 = scmp.eq.s32.totalorder %s24, 1
      %p115 = por %p113, %p114
      %p116 = scmp.ne.s32.totalorder %s105, %s106
      %p117 = scmp.eq.s32.totalorder %s24, 0
      %p118 = por %p116, %p117
      %p119 = scmp.ne.s32.totalorder %s105, %s106
      %p120 = scmp.eq.s32.totalorder %s25, 1
      %p121 = por %p119, %p120
      %p123 = scmp.ne.s32.totalorder %s106, %s122
      %p124 = scmp.eq.s32.totalorder %s25, 0
      %p125 = por %p123, %p124
      %p126 = scmp.le.s32.totalorder 1, %s19
      %p127 = scmp.lt.s32.totalorder %s19, 3
      %p128 = pnand %p126, %p127
      %p129 = pneg %p128
      // Predicated region
      $region9: #{tpu_custom_call.1} parent=5 // pred_check
        _
      $region10: #{tpu_custom_call.1} parent=5 // pred_check_branch
        %131 = sbr.rel (%p128) target = $region12
      $region11: #{tpu_custom_call.1} parent=5 // pred_region
        %s132 = ssub.s32 %s19, 1
        // Predicated region
        $region13: #{tpu_custom_call.1} parent=11 // pred_check
          %p133 = pneg %p40
        $region14: #{tpu_custom_call.1} parent=11 // pred_check_branch
          %135 = sbr.rel (%p133) target = $region16
        $region15: #{tpu_custom_call.1} parent=11 // pred_region
          _
        $region16: #{tpu_custom_call.1} parent=11 // pred_fallthru
          _
      $region12: #{tpu_custom_call.1} parent=5 // pred_fallthru
        _
      %p136 = scmp.lt.s32.totalorder %s19, 2
      // Predicated region
      $region17: #{tpu_custom_call.1} parent=5 // pred_check
        %p137 = pneg %p136
      $region18: #{tpu_custom_call.1} parent=5 // pred_check_branch
        %139 = sbr.rel (%p137) target = $region20
      $region19: #{tpu_custom_call.1} parent=5 // pred_region
        // Predicated region
        $region21: #{tpu_custom_call.1} parent=19 // pred_check
          %p140 = pneg %p60
        $region22: #{tpu_custom_call.1} parent=19 // pred_check_branch
          %142 = sbr.rel (%p140) target = $region24
        $region23: #{tpu_custom_call.1} parent=19 // pred_region
          %s143 = sand.u32 %s50, 1
          %s144 = scalar_lea.sflag [#allocation4], %s143
          %s145 = sand.u32 %s50, 1
          %s146 = smul.addr %s145, 16
          %s147 = scalar_lea.vmem [#allocation3], %s146
          %s148 = smul.u32 2, %s19
          %s149 = ssub.s32 3, %s148
          %p150 = scmp.lt.s32.totalorder %s149, 2
          %s151 = scalar_select %p150, %s149, 2
          %s152 = smul.u32 128, %s151
          %s154 = ssub.s32 256, %s152
          %155 = vsyncadd %s144, %s154
          %p156 = scmp.ne.s32.totalorder 0, %s152
          %s157 = smul.addr %s148, 128
          %s158 = scalar_lea.hbm %s1, %s157
          %s159 = smul.u32 8, %s151
          %s160 = sshll.u32 %s147, 4
          %s161 = int_to_ptr.vmem [resolvable:$true] %s160
          %s162 = sshll.u32 %s159, 4
          %166 = dma.hbm_to_vmem [thread:$0]  (%p156), %s158, %s162, %s161, %s144, 128, 128, 8
        $region24: #{tpu_custom_call.1} parent=19 // pred_fallthru
          _
        // Predicated region
        $region25: #{tpu_custom_call.1} parent=19 // pred_check
          %p167 = pneg %p86
        $region26: #{tpu_custom_call.1} parent=19 // pred_check_branch
          %169 = sbr.rel (%p167) target = $region28
        $region27: #{tpu_custom_call.1} parent=19 // pred_region
          %s170 = sand.u32 %s76, 1
          %s171 = scalar_lea.sflag [#allocation7], %s170
          %s172 = sand.u32 %s76, 1
          %s173 = smul.addr %s172, 16
          %s174 = scalar_lea.vmem [#allocation6], %s173
          %s175 = smul.u32 2, %s19
          %s176 = ssub.s32 3, %s175
          %p177 = scmp.lt.s32.totalorder %s176, 2
          %s178 = scalar_select %p177, %s176, 2
          %s179 = smul.u32 128, %s178
          %s181 = ssub.s32 256, %s179
          %182 = vsyncadd %s171, %s181
          %p183 = scmp.ne.s32.totalorder 0, %s179
          %s184 = smul.addr %s175, 128
          %s185 = scalar_lea.hbm %s2, %s184
          %s186 = smul.u32 8, %s178
          %s187 = sshll.u32 %s174, 4
          %s188 = int_to_ptr.vmem [resolvable:$true] %s187
          %s189 = sshll.u32 %s186, 4
          %193 = dma.hbm_to_vmem [thread:$0]  (%p183), %s185, %s189, %s188, %s171, 128, 128, 8
        $region28: #{tpu_custom_call.1} parent=19 // pred_fallthru
          _
      $region20: #{tpu_custom_call.1} parent=5 // pred_fallthru
        _
      %p194 = scmp.le.s32.totalorder 1, %s19
      %p195 = scmp.lt.s32.totalorder %s19, 3
      %p196 = pnand %p194, %p195
      %p197 = pneg %p196
      // Predicated region
      $region29: #{tpu_custom_call.1} parent=5 // pred_check
        _
      $region30: #{tpu_custom_call.1} parent=5 // pred_check_branch
        %199 = sbr.rel (%p196) target = $region32
      $region31: #{tpu_custom_call.1} parent=5 // pred_region
        %s200 = ssub.s32 %s19, 1
        %s201 = sand.u32 %s53, 1
        %s202 = scalar_lea.sflag [#allocation4], %s201
        %s203 = sand.u32 %s53, 1
        %s204 = smul.addr %s203, 16
        %s205 = scalar_lea.vmem [#allocation3], %s204
        // Predicated region
        $region33: #{tpu_custom_call.1} parent=31 // pred_check
          %p206 = pneg %p66
        $region34: #{tpu_custom_call.1} parent=31 // pred_check_branch
          %208 = sbr.rel (%p206) target = $region36
        $region35: #{tpu_custom_call.1} parent=31 // pred_region
          %209 = dma.done %s202, 256
        $region36: #{tpu_custom_call.1} parent=31 // pred_fallthru
          _
        %s210 = sand.u32 %s79, 1
        %s211 = scalar_lea.sflag [#allocation7], %s210
        %s212 = sand.u32 %s79, 1
        %s213 = smul.addr %s212, 16
        %s214 = scalar_lea.vmem [#allocation6], %s213
        // Predicated region
        $region37: #{tpu_custom_call.1} parent=31 // pred_check
          %p215 = pneg %p92
        $region38: #{tpu_custom_call.1} parent=31 // pred_check_branch
          %217 = sbr.rel (%p215) target = $region40
        $region39: #{tpu_custom_call.1} parent=31 // pred_region
          %218 = dma.done %s211, 256
        $region40: #{tpu_custom_call.1} parent=31 // pred_fallthru
          _
        %p219 = pneg %p40
        %p220 = pneg %p37
        %s221 = sand.u32 %s53, 1
        %s222 = scalar_lea.sflag [#allocation4], %s221
        %s223 = sand.u32 %s53, 1
        %s224 = smul.addr %s223, 16
        %s225 = scalar_lea.vmem [#allocation3], %s224
        %p226 = pneg %p66
        %p227 = pneg %p63
        %s228 = sand.u32 %s79, 1
        %s229 = scalar_lea.sflag [#allocation7], %s228
        %s230 = sand.u32 %s79, 1
        %s231 = smul.addr %s230, 16
        %s232 = scalar_lea.vmem [#allocation6], %s231
        %p233 = pneg %p92
        %p234 = pneg %p89
        %p235 = pneg %p118
        %p236 = pneg %p115
        %s237 = sand.u32 %s105, 1
        %s238 = scalar_lea.sflag [#allocation5], %s237
        %s239 = sand.u32 %s105, 1
        %s240 = smul.addr %s239, 16
        %s241 = scalar_lea.vmem [#allocation8], %s240
        %s242 = smul.u32 2, %s24
        %s243 = ssub.s32 3, %s242
        %p244 = scmp.lt.s32.totalorder %s243, 2
        %s245 = scalar_select %p244, %s243, 2
        %s246 = smul.u32 128, %s245
        %s247 = smul.u32 2, %s24
        %s248 = ssub.s32 3, %s247
        %p249 = scmp.lt.s32.totalorder %s248, 2
        %s250 = scalar_select %p249, %s248, 2
        %s251 = smul.u32 128, %s250
        %s252 = smul.u32 2, %s24
        %s253 = ssub.s32 3, %s252
        %p254 = scmp.lt.s32.totalorder %s253, 2
        %s255 = scalar_select %p254, %s253, 2
        %s256 = smul.u32 128, %s255
        %s257 = sld [smem:[#allocation2]]
        %v258 = vld [vmem:[%s205] sm:$0xff]
        %v259 = vld [vmem:[%s205 + $0x8] sm:$0xff]
        %v260 = vstv %s257
        %vm261 = vcmp.eq.f32.partialorder %v258, %v260
        %vm262 = vcmp.eq.f32.partialorder %v259, %v260
        %v263 = vsel %vm261, 1, 0
        %v264 = vsel %vm262, 1, 0
        %v265 = vcvt.s32.f32 %v263
        %v266 = vcvt.s32.f32 %v264
        %v267 = vld [vmem:[%s214] sm:$0xff]
        %v268 = vld [vmem:[%s214 + $0x8] sm:$0xff]
        %v269 = vmul.f32 %v265, %v267
        %v270 = vmul.f32 %v266, %v268
        %271 = vst [vmem:[%s241] sm:$0xff] %v269
        %272 = vst [vmem:[%s241 + $0x8] sm:$0xff] %v270
        %s273 = sand.u32 %s105, 1
        %s274 = scalar_lea.sflag [#allocation5], %s273
        %s275 = sand.u32 %s105, 1
        %s276 = smul.addr %s275, 16
        %s277 = scalar_lea.vmem [#allocation8], %s276
        // Predicated region
        $region41: #{tpu_custom_call.1} parent=31 // pred_check
          %p278 = pneg %p115
        $region42: #{tpu_custom_call.1} parent=31 // pred_check_branch
          %280 = sbr.rel (%p278) target = $region44
        $region43: #{tpu_custom_call.1} parent=31 // pred_region
          %s281 = smul.u32 2, %s24
          %s282 = ssub.s32 3, %s281
          %p283 = scmp.lt.s32.totalorder %s282, 2
          %s284 = scalar_select %p283, %s282, 2
          %s285 = smul.u32 128, %s284
          %s287 = ssub.s32 256, %s285
          %288 = vsyncadd %s274, %s287
          %p289 = scmp.ne.s32.totalorder 0, %s285
          %s290 = smul.addr %s281, 128
          %s291 = scalar_lea.hbm %s3, %s290
          %s292 = smul.u32 8, %s284
          %s293 = sshll.u32 %s277, 4
          %s294 = int_to_ptr.vmem [resolvable:$true] %s293
          %s295 = sshll.u32 %s292, 4
          %299 = dma.vmem_to_hbm [thread:$0]  (%p289), %s294, %s295, %s291, %s274, 128, 128, 8
        $region44: #{tpu_custom_call.1} parent=31 // pred_fallthru
          _
      $region32: #{tpu_custom_call.1} parent=5 // pred_fallthru
        _
      %p300 = scmp.le.s32.totalorder 2, %s19
      // Predicated region
      $region45: #{tpu_custom_call.1} parent=5 // pred_check
        %p301 = pneg %p300
      $region46: #{tpu_custom_call.1} parent=5 // pred_check_branch
        %303 = sbr.rel (%p301) target = $region48
      $region47: #{tpu_custom_call.1} parent=5 // pred_region
        %s304 = ssub.s32 %s19, 2
        // Predicated region
        $region49: #{tpu_custom_call.1} parent=47 // pred_check
          %p305 = pneg %p121
        $region50: #{tpu_custom_call.1} parent=47 // pred_check_branch
          %307 = sbr.rel (%p305) target = $region52
        $region51: #{tpu_custom_call.1} parent=47 // pred_region
          %s308 = sand.u32 %s106, 1
          %s309 = scalar_lea.sflag [#allocation5], %s308
          %s310 = sand.u32 %s106, 1
          %s311 = smul.addr %s310, 16
          %s312 = scalar_lea.vmem [#allocation8], %s311
          %313 = dma.done %s309, 256
        $region52: #{tpu_custom_call.1} parent=47 // pred_fallthru
          _
      $region48: #{tpu_custom_call.1} parent=5 // pred_fallthru
        _
    $region6: #{tpu_custom_call.1} parent=1 // loop_footer
      %s23 = sadd.s32 1, %s19
    $region7: #{tpu_custom_call.1} parent=1 // loop_footer_branch
      %18 = sbr.rel target = $region3
    $region8: #{tpu_custom_call.1} parent=1 // loop_exit
      _
    %314 = vsyncpa [#allocation4], 1
    %s315 = scalar_lea.sflag [#allocation4], 1
    %316 = vsyncpa %s315, 1
    %317 = vsyncpa [#allocation7], 1
    %s318 = scalar_lea.sflag [#allocation7], 1
    %319 = vsyncpa %s318, 1
    %320 = vsyncpa [#allocation5], 1
    %s321 = scalar_lea.sflag [#allocation5], 1
    %322 = vsyncpa %s321, 1

</llo_original>
